<compile_context>
chip_gen: v5e
topology: v5e:2x2
jax: 0.10.0
libtpu: 0.0.40
codegen_flags: <defaults>
</compile_context>

<pallas_src>
import functools

import jax
import jax.numpy as jnp
from jax import lax
from jax.experimental import pallas as pl
from jax.experimental.pallas import tpu as pltpu


def _round_up(x, m):
    return ((x + m - 1) // m) * m


_NEG_BIG = -1e30  # large negative instead of -inf: avoids NaN corner cases


def _flash_attn_kernel(q_ref, k_ref, v_ref, o_ref, m_sc, l_sc, acc_sc,
                       *, inv_temp, sk, tk, mask_kv):
    kv = pl.program_id(2)

    @pl.when(kv == 0)
    def _():
        m_sc[...] = jnp.full_like(m_sc, _NEG_BIG)
        l_sc[...] = jnp.zeros_like(l_sc)
        acc_sc[...] = jnp.zeros_like(acc_sc)

    # Fold temperature into Q (stays in input dtype; O(tq*D) per step).
    q = q_ref[0] * inv_temp          # (tq, Dp)
    k = k_ref[0]                     # (tk, Dp)
    v = v_ref[0]                     # (tk, Dp)

    # scores = Q @ K^T : contract the last (lane) dims, no explicit transpose.
    s = lax.dot_general(
        q, k,
        dimension_numbers=(((1,), (1,)), ((), ())),
        preferred_element_type=jnp.float32)          # (tq, tk) f32

    if mask_kv:
        # Mask padded key positions (only emitted when Sk was padded).
        col = kv * tk + lax.broadcasted_iota(jnp.int32, s.shape, 1)
        s = jnp.where(col < sk, s, _NEG_BIG)

    # Online (flash) softmax update.
    m_prev = m_sc[...]
    m_new = jnp.maximum(m_prev, jnp.max(s, axis=-1, keepdims=True))
    alpha = jnp.exp(m_prev - m_new)
    p = jnp.exp(s - m_new)
    l_sc[...] = alpha * l_sc[...] + jnp.sum(p, axis=-1, keepdims=True)
    acc_sc[...] = alpha * acc_sc[...] + jnp.dot(
        p.astype(v.dtype), v, preferred_element_type=jnp.float32)
    m_sc[...] = m_new

    @pl.when(kv == pl.num_programs(2) - 1)
    def _():
        # Normalize the (tq, Dp) output once, via reciprocal-multiply.
        # approx reciprocal only when the output dtype tolerates it.
        approx = o_ref.dtype != jnp.float32
        inv_l = pl.reciprocal(l_sc[...], approx=approx)
        o_ref[0] = (acc_sc[...] * inv_l).astype(o_ref.dtype)


def attention(query, key, value, temperature=None, *, tq=256, tk=256):
    """Pallas equivalent of Attention.forward(query, key, value, temperature).

    query: (B, Sq, D), key/value: (B, Sk, D). Output: (B, Sq, D).
    """
    B, Sq, D = query.shape
    Bk, Sk, Dk = key.shape
    assert B == Bk and D == Dk and value.shape == (B, Sk, D)

    if temperature is None:
        temperature = float(D) ** 0.5
    inv_temp = 1.0 / float(temperature)

    # Lane-dense feature dim; sublane-aligned seq tiles.
    Dp = _round_up(D, 128)
    tq = min(tq, _round_up(Sq, 8))
    tk = min(tk, _round_up(Sk, 8))
    Sq_p = _round_up(Sq, tq)
    Sk_p = _round_up(Sk, tk)

    def _pad(x, s_p):
        s, d = x.shape[1], x.shape[2]
        if s == s_p and d == Dp:
            return x
        return jnp.pad(x, ((0, 0), (0, s_p - s), (0, Dp - d)))

    qp = _pad(query, Sq_p)
    kp = _pad(key, Sk_p)
    vp = _pad(value, Sk_p)

    nq = Sq_p // tq
    nk = Sk_p // tk

    kernel = functools.partial(
        _flash_attn_kernel,
        inv_temp=inv_temp, sk=Sk, tk=tk, mask_kv=(Sk_p != Sk))

    out = pl.pallas_call(
        kernel,
        out_shape=jax.ShapeDtypeStruct((B, Sq_p, Dp), query.dtype),
        grid_spec=pltpu.PrefetchScalarGridSpec(
            num_scalar_prefetch=0,
            grid=(B, nq, nk),
            in_specs=[
                pl.BlockSpec((1, tq, Dp), lambda b, qi, ki: (b, qi, 0)),
                pl.BlockSpec((1, tk, Dp), lambda b, qi, ki: (b, ki, 0)),
                pl.BlockSpec((1, tk, Dp), lambda b, qi, ki: (b, ki, 0)),
            ],
            out_specs=pl.BlockSpec((1, tq, Dp), lambda b, qi, ki: (b, qi, 0)),
            scratch_shapes=[
                pltpu.VMEM((tq, 1), jnp.float32),    # running max m
                pltpu.VMEM((tq, 1), jnp.float32),    # running denom l
                pltpu.VMEM((tq, Dp), jnp.float32),   # output accumulator
            ],
        ),
        compiler_params=pltpu.CompilerParams(
            dimension_semantics=("parallel", "parallel", "arbitrary")),
    )(qp, kp, vp)

    if Sq_p != Sq or Dp != D:
        out = out[:, :Sq, :D]
    return out


def _attention_ref(query, key, value, temperature=None):
    """Pure-JAX reference mirroring the PyTorch forward."""
    if temperature is None:
        temperature = float(key.shape[-1]) ** 0.5
    scores = jnp.einsum("bqd,bkd->bqk", query, key) / temperature
    attn = jax.nn.softmax(scores, axis=-1)
    return jnp.einsum("bqk,bkd->bqd", attn, value)


if __name__ == "__main__":
    key0 = jax.random.PRNGKey(0)
    kq, kk, kv = jax.random.split(key0, 3)

    B, Sq, Sk, D = 2, 8, 8, 32
    query = jax.random.normal(kq, (B, Sq, D), dtype=jnp.float32)
    key = jax.random.normal(kk, (B, Sk, D), dtype=jnp.float32)
    value = jax.random.normal(kv, (B, Sk, D), dtype=jnp.float32)

    # temperature=None path (defaults to sqrt(D)), as in the PyTorch module.
    out = attention(query, key, value, temperature=None)
    out = jax.block_until_ready(out)

    ref = _attention_ref(query, key, value, temperature=None)
    assert out.shape == (B, Sq, D)
    assert jnp.allclose(out, ref, atol=1e-5, rtol=1e-5), "mismatch vs reference"

    # Explicit temperature value.
    out2 = jax.block_until_ready(attention(query, key, value, temperature=2.0))
    ref2 = _attention_ref(query, key, value, temperature=2.0)
    assert jnp.allclose(out2, ref2, atol=1e-5, rtol=1e-5), "mismatch vs reference (temp=2.0)"

    # Exercise an un-aligned / larger shape to cover padding+masking+tiling.
    kq2, kk2, kv2 = jax.random.split(jax.random.PRNGKey(1), 3)
    B2, Sq2, Sk2, D2 = 2, 300, 200, 48
    q3 = jax.random.normal(kq2, (B2, Sq2, D2), dtype=jnp.float32)
    k3 = jax.random.normal(kk2, (B2, Sk2, D2), dtype=jnp.float32)
    v3 = jax.random.normal(kv2, (B2, Sk2, D2), dtype=jnp.float32)
    out3 = jax.block_until_ready(attention(q3, k3, v3, temperature=None, tq=128, tk=128))
    ref3 = _attention_ref(q3, k3, v3, temperature=None)
    assert jnp.allclose(out3, ref3, atol=1e-4, rtol=1e-4), "mismatch vs reference (tiled)"

    print("KERNEL_OK")
</pallas_src>

<mosaic_0001>
module attributes {stable_mosaic.version = 11 : i64} {
  func.func @_flash_attn_kernel(%arg0: i32, %arg1: i32, %arg2: i32, %arg3: memref<1x8x128xf32, #tpu.memory_space<vmem>>, %arg4: memref<1x8x128xf32, #tpu.memory_space<vmem>>, %arg5: memref<1x8x128xf32, #tpu.memory_space<vmem>>, %arg6: memref<1x8x128xf32, #tpu.memory_space<vmem>>, %arg7: memref<8x1xf32, #tpu.memory_space<vmem>>, %arg8: memref<8x1xf32, #tpu.memory_space<vmem>>, %arg9: memref<8x128xf32, #tpu.memory_space<vmem>>) attributes {dimension_semantics = [#tpu.dimension_semantics<parallel>, #tpu.dimension_semantics<parallel>, #tpu.dimension_semantics<arbitrary>], iteration_bounds = array<i64: 2, 1, 1>, scalar_prefetch = 0 : i64, scratch_operands = 3 : i64, tpu.core_type = #tpu.core_type<tc>, window_params = [{transform_indices = @transform_0, window_bounds = array<i64: 1, 8, 128>}, {transform_indices = @transform_1, window_bounds = array<i64: 1, 8, 128>}, {transform_indices = @transform_2, window_bounds = array<i64: 1, 8, 128>}, {transform_indices = @transform_3, window_bounds = array<i64: 1, 8, 128>}]} {
    %c0_i32 = arith.constant 0 : i32
    %0 = arith.cmpi eq, %arg2, %c0_i32 : i32
    %1 = arith.extui %0 : i1 to i32
    %c0_i32_0 = arith.constant 0 : i32
    %2 = arith.cmpi ne, %1, %c0_i32_0 : i32
    scf.if %2 {
      %cst_27 = arith.constant -1.000000e+30 : f32
      %37 = vector.broadcast %cst_27 : f32 to vector<8x1xf32>
      %c0_28 = arith.constant 0 : index
      %c0_29 = arith.constant 0 : index
      %38 = vector.load %arg7[%c0_28, %c0_29] : memref<8x1xf32, #tpu.memory_space<vmem>>, vector<8x1xf32>
      tpu.vector_store %arg7[%c0_28, %c0_29], %37 {strides = array<i32>} : memref<8x1xf32, #tpu.memory_space<vmem>>, vector<8x1xf32>,
      %cst_30 = arith.constant 0.000000e+00 : f32
      %39 = vector.broadcast %cst_30 : f32 to vector<8x1xf32>
      %c0_31 = arith.constant 0 : index
      %c0_32 = arith.constant 0 : index
      %40 = vector.load %arg8[%c0_31, %c0_32] : memref<8x1xf32, #tpu.memory_space<vmem>>, vector<8x1xf32>
      tpu.vector_store %arg8[%c0_31, %c0_32], %39 {strides = array<i32>} : memref<8x1xf32, #tpu.memory_space<vmem>>, vector<8x1xf32>,
      %cst_33 = arith.constant 0.000000e+00 : f32
      %41 = vector.broadcast %cst_33 : f32 to vector<8x128xf32>
      %c0_34 = arith.constant 0 : index
      %c0_35 = arith.constant 0 : index
      %42 = vector.load %arg9[%c0_34, %c0_35] : memref<8x128xf32, #tpu.memory_space<vmem>>, vector<8x128xf32>
      tpu.vector_store %arg9[%c0_34, %c0_35], %41 {strides = array<i32>} : memref<8x128xf32, #tpu.memory_space<vmem>>, vector<8x128xf32>,
    } else {
    }
    %c0 = arith.constant 0 : index
    %c0_1 = arith.constant 0 : index
    %c0_2 = arith.constant 0 : index
    %3 = vector.load %arg3[%c0, %c0_1, %c0_2] : memref<1x8x128xf32, #tpu.memory_space<vmem>>, vector<1x8x128xf32>
    %4 = vector.shape_cast %3 : vector<1x8x128xf32> to vector<8x128xf32>
    %cst = arith.constant 0.176776692 : f32
    %5 = vector.broadcast %cst : f32 to vector<8x128xf32>
    %6 = arith.mulf %4, %5 : vector<8x128xf32>
    %c0_3 = arith.constant 0 : index
    %c0_4 = arith.constant 0 : index
    %c0_5 = arith.constant 0 : index
    %7 = vector.load %arg4[%c0_3, %c0_4, %c0_5] : memref<1x8x128xf32, #tpu.memory_space<vmem>>, vector<1x8x128xf32>
    %8 = vector.shape_cast %7 : vector<1x8x128xf32> to vector<8x128xf32>
    %c0_6 = arith.constant 0 : index
    %c0_7 = arith.constant 0 : index
    %c0_8 = arith.constant 0 : index
    %9 = vector.load %arg5[%c0_6, %c0_7, %c0_8] : memref<1x8x128xf32, #tpu.memory_space<vmem>>, vector<1x8x128xf32>
    %10 = vector.shape_cast %9 : vector<1x8x128xf32> to vector<8x128xf32>
    %cst_9 = arith.constant dense<0.000000e+00> : vector<8x8xf32>
    %11 = tpu.matmul %6, %8, %cst_9 {dimension_numbers = #tpu.dot_dimension_numbers<[1], [1], [0], [0], [0, 0, 1, 0], [], []>} : vector<8x128xf32>, vector<8x128xf32>, vector<8x8xf32> -> vector<8x8xf32>
    %c0_10 = arith.constant 0 : index
    %c0_11 = arith.constant 0 : index
    %12 = vector.load %arg7[%c0_10, %c0_11] : memref<8x1xf32, #tpu.memory_space<vmem>>, vector<8x1xf32>
    %cst_12 = arith.constant dense<0xFF800000> : vector<8xf32>
    %13 = vector.multi_reduction <maximumf>, %11, %cst_12 [1] : vector<8x8xf32> to vector<8xf32>
    %14 = vector.shape_cast %13 : vector<8xf32> to vector<8x1xf32>
    %15 = arith.maximumf %12, %14 : vector<8x1xf32>
    %16 = arith.subf %12, %15 : vector<8x1xf32>
    %17 = math.exp %16 : vector<8x1xf32>
    %18 = vector.broadcast %15 : vector<8x1xf32> to vector<8x8xf32>
    %19 = arith.subf %11, %18 : vector<8x8xf32>
    %20 = math.exp %19 : vector<8x8xf32>
    %c0_13 = arith.constant 0 : index
    %c0_14 = arith.constant 0 : index
    %21 = vector.load %arg8[%c0_13, %c0_14] : memref<8x1xf32, #tpu.memory_space<vmem>>, vector<8x1xf32>
    %22 = arith.mulf %17, %21 : vector<8x1xf32>
    %cst_15 = arith.constant dense<0.000000e+00> : vector<8xf32>
    %23 = vector.multi_reduction <add>, %20, %cst_15 [1] : vector<8x8xf32> to vector<8xf32>
    %24 = vector.shape_cast %23 : vector<8xf32> to vector<8x1xf32>
    %25 = arith.addf %22, %24 : vector<8x1xf32>
    %c0_16 = arith.constant 0 : index
    %c0_17 = arith.constant 0 : index
    %26 = vector.load %arg8[%c0_16, %c0_17] : memref<8x1xf32, #tpu.memory_space<vmem>>, vector<8x1xf32>
    tpu.vector_store %arg8[%c0_16, %c0_17], %25 {strides = array<i32>} : memref<8x1xf32, #tpu.memory_space<vmem>>, vector<8x1xf32>,
    %c0_18 = arith.constant 0 : index
    %c0_19 = arith.constant 0 : index
    %27 = vector.load %arg9[%c0_18, %c0_19] : memref<8x128xf32, #tpu.memory_space<vmem>>, vector<8x128xf32>
    %28 = vector.broadcast %17 : vector<8x1xf32> to vector<8x128xf32>
    %29 = arith.mulf %28, %27 : vector<8x128xf32>
    %cst_20 = arith.constant dense<0.000000e+00> : vector<8x128xf32>
    %30 = tpu.matmul %20, %10, %cst_20 {dimension_numbers = #tpu.dot_dimension_numbers<[1], [0], [0], [1], [0, 0, 1, 1], [], []>} : vector<8x8xf32>, vector<8x128xf32>, vector<8x128xf32> -> vector<8x128xf32>
    %31 = arith.addf %29, %30 : vector<8x128xf32>
    %c0_21 = arith.constant 0 : index
    %c0_22 = arith.constant 0 : index
    %32 = vector.load %arg9[%c0_21, %c0_22] : memref<8x128xf32, #tpu.memory_space<vmem>>, vector<8x128xf32>
    tpu.vector_store %arg9[%c0_21, %c0_22], %31 {strides = array<i32>} : memref<8x128xf32, #tpu.memory_space<vmem>>, vector<8x128xf32>,
    %c0_23 = arith.constant 0 : index
    %c0_24 = arith.constant 0 : index
    %33 = vector.load %arg7[%c0_23, %c0_24] : memref<8x1xf32, #tpu.memory_space<vmem>>, vector<8x1xf32>
    tpu.vector_store %arg7[%c0_23, %c0_24], %15 {strides = array<i32>} : memref<8x1xf32, #tpu.memory_space<vmem>>, vector<8x1xf32>,
    %c0_i32_25 = arith.constant 0 : i32
    %34 = arith.cmpi eq, %arg2, %c0_i32_25 : i32
    %35 = arith.extui %34 : i1 to i32
    %c0_i32_26 = arith.constant 0 : i32
    %36 = arith.cmpi ne, %35, %c0_i32_26 : i32
    scf.if %36 {
      %c0_27 = arith.constant 0 : index
      %c0_28 = arith.constant 0 : index
      %37 = vector.load %arg8[%c0_27, %c0_28] : memref<8x1xf32, #tpu.memory_space<vmem>>, vector<8x1xf32>
      %38 = tpu.reciprocal %37 : vector<8x1xf32> -> vector<8x1xf32>
      %c0_29 = arith.constant 0 : index
      %c0_30 = arith.constant 0 : index
      %39 = vector.load %arg9[%c0_29, %c0_30] : memref<8x128xf32, #tpu.memory_space<vmem>>, vector<8x128xf32>
      %40 = vector.broadcast %38 : vector<8x1xf32> to vector<8x128xf32>
      %41 = arith.mulf %39, %40 : vector<8x128xf32>
      %c0_31 = arith.constant 0 : index
      %c0_32 = arith.constant 0 : index
      %c0_33 = arith.constant 0 : index
      %42 = vector.load %arg6[%c0_31, %c0_32, %c0_33] : memref<1x8x128xf32, #tpu.memory_space<vmem>>, vector<1x8x128xf32>
      %43 = vector.shape_cast %42 : vector<1x8x128xf32> to vector<8x128xf32>
      %44 = vector.shape_cast %41 : vector<8x128xf32> to vector<1x8x128xf32>
      tpu.vector_store %arg6[%c0_31, %c0_32, %c0_33], %44 {strides = array<i32>} : memref<1x8x128xf32, #tpu.memory_space<vmem>>, vector<1x8x128xf32>,
    } else {
    }
    return
  }
  func.func @transform_0(%arg0: i32, %arg1: i32, %arg2: i32) -> (i32, i32, i32) {
    %c0_i32 = arith.constant 0 : i32
    %c0_i32_0 = arith.constant 0 : i32
    return %arg0, %arg1, %c0_i32 : i32, i32, i32
  }
  func.func @transform_1(%arg0: i32, %arg1: i32, %arg2: i32) -> (i32, i32, i32) {
    %c0_i32 = arith.constant 0 : i32
    %c0_i32_0 = arith.constant 0 : i32
    return %arg0, %arg2, %c0_i32 : i32, i32, i32
  }
  func.func @transform_2(%arg0: i32, %arg1: i32, %arg2: i32) -> (i32, i32, i32) {
    %c0_i32 = arith.constant 0 : i32
    %c0_i32_0 = arith.constant 0 : i32
    return %arg0, %arg2, %c0_i32 : i32, i32, i32
  }
  func.func @transform_3(%arg0: i32, %arg1: i32, %arg2: i32) -> (i32, i32, i32) {
    %c0_i32 = arith.constant 0 : i32
    %c0_i32_0 = arith.constant 0 : i32
    return %arg0, %arg1, %c0_i32 : i32, i32, i32
  }
}

</mosaic_0001>

<llo_original>
// kernel: tpu_custom_call.1
$region0: #{tpu_custom_call.1}
  #allocation0 [shape = 'u32[]', space=smem, size = 0x4, offset = 0x4, fixed_abs, tag = 'smem constant byte address 0x4 - core index']
  #allocation1 [shape = 'u32[72,128]{1,0:T(1,128)}', space=vmem, size = 0x9000, scoped, tag = 'internal scratch']
  #allocation2 [shape = 'f32[8,1]{1,0:T(8,128)}', space=vmem, size = 0x1000, scoped, tag = 'scratch operand']
  #allocation3 [shape = 'f32[8,1]{1,0:T(8,128)}', space=vmem, size = 0x1000, scoped, tag = 'scratch operand']
  #allocation4 [shape = 'f32[8,128]{1,0:T(8,128)}', space=vmem, size = 0x1000, scoped, tag = 'scratch operand']
  %s0 = inlined_call_operand.hbm [shape: f32[2,8,128], index: 0, kind: input, shape index: {}]
  %s1 = inlined_call_operand.hbm [shape: f32[2,8,128], index: 1, kind: input, shape index: {}]
  %s2 = inlined_call_operand.hbm [shape: f32[2,8,128], index: 2, kind: input, shape index: {}]
  %s3 = inlined_call_operand.hbm [shape: f32[2,8,128], index: 3, kind: output, shape index: {}]
  %s4 = sld [smem:[#allocation0]]
  $region65: #{tpu_custom_call.1} parent=0
    _
  %s6 = ssub.s32 1, %s4
  %s7 = scalar_select 0, %s6, %s4
  $region1: #{tpu_custom_call.1} parent=0
    #allocation5 [shape = 'u8[8192]{0}', space=vmem, size = 0x2000, scoped, tag = 'input window, operand 0']
    #allocation6 [shape = 's32[2]{0}', space=sflag, size = 0x8, scoped, tag = 'scoped memory for tpu_custom_call.1']
    #allocation7 [shape = 's32[2]{0}', space=sflag, size = 0x8, scoped, tag = 'scoped memory for tpu_custom_call.1']
    #allocation8 [shape = 'u8[8192]{0}', space=vmem, size = 0x2000, scoped, tag = 'input window, operand 1']
    #allocation9 [shape = 's32[2]{0}', space=sflag, size = 0x8, scoped, tag = 'scoped memory for tpu_custom_call.1']
    #allocation10 [shape = 'u8[8192]{0}', space=vmem, size = 0x2000, scoped, tag = 'input window, operand 2']
    #allocation11 [shape = 'u8[8192]{0}', space=vmem, size = 0x2000, scoped, tag = 'output window, operand 0']
    %8 = vsyncpa [#allocation6], 0
    %s9 = scalar_lea.sflag [#allocation6], 1
    %10 = vsyncpa %s9, 0
    %11 = vsyncpa [#allocation9], 0
    %s12 = scalar_lea.sflag [#allocation9], 1
    %13 = vsyncpa %s12, 0
    %14 = vsyncpa [#allocation7], 0
    %s15 = scalar_lea.sflag [#allocation7], 1
    %16 = vsyncpa %s15, 0
    loop: start=0, step=1, limit=4
    $region2: #{tpu_custom_call.1} parent=1 // loop_pre_header
      _
    $region3: #{tpu_custom_call.1} parent=1 // loop_header
      %s18 = sphi 0, %s22
      %p19 = scmp.ge.s32.totalorder %s18, 4
      %s25 = sphi 0, %s44
      %s26 = sphi 0, %s40
      %s27 = sphi 0, %s36
      %s28 = sphi 0, %s25
      %s29 = sphi 0, %s26
      %s30 = sphi 0, %s27
      %s31 = sphi 0, %s28
      %s32 = sphi 0, %s29
      %s33 = sphi 0, %s30
      %s49 = sphi 0, %s51
      %s52 = sphi 0, %s49
      %s53 = sphi 0, %s52
      %s69 = sphi 0, %s53
      %s77 = sphi 0, %s79
      %s80 = sphi 0, %s77
      %s81 = sphi 0, %s80
      %s97 = sphi 0, %s81
      %s105 = sphi 0, %s107
      %s108 = sphi 0, %s105
      %s109 = sphi 0, %s108
      %s125 = sphi 0, %s109
      %s133 = sphi 0, %s135
      %s136 = sphi 0, %s133
      %s137 = sphi 0, %s136
      %s153 = sphi 0, %s137
    $region4: #{tpu_custom_call.1} parent=1 // loop_header_branch
      %21 = sbr.rel (%p19) target = $region8
    $region5: #{tpu_custom_call.1} parent=1 // loop_body
      %s23 = ssub.s32 %s18, 1
      %s24 = ssub.s32 %s18, 2
      %s34 = sadd.s32 1, %s27
      %p35 = scmp.ge.s32.totalorder %s34, 1
      %s36 = scalar_select %p35, 0, %s34
      %s37 = sadd.s32 1, %s26
      %s38 = scalar_select %p35, %s37, %s26
      %p39 = scmp.ge.s32.totalorder %s38, 1
      %s40 = scalar_select %p39, 0, %s38
      %s41 = sadd.s32 1, %s25
      %s42 = scalar_select %p39, %s41, %s25
      %p43 = scmp.ge.s32.totalorder %s42, 2
      %s44 = scalar_select %p43, 0, %s42
      %s45 = ssub.s32 %s25, %s44
      %s46 = ssub.s32 %s26, %s40
      %s47 = sor.u32 %s45, %s46
      %p48 = scmp.eq.s32.totalorder %s47, 0
      %s50 = sadd.s32 %s49, 1
      %s51 = scalar_select %p48, %s49, %s50
      %p54 = pneg %p48
      %p55 = scmp.eq.s32.totalorder %s18, 1
      %p56 = por %p54, %p55
      %p57 = scmp.ne.s32.totalorder %s49, %s52
      %p58 = scmp.eq.s32.totalorder %s18, 0
      %p59 = por %p57, %p58
      %p60 = scmp.ne.s32.totalorder %s49, %s52
      %p61 = scmp.eq.s32.totalorder %s23, 1
      %p62 = por %p60, %p61
      %p63 = scmp.ne.s32.totalorder %s52, %s53
      %p64 = scmp.eq.s32.totalorder %s23, 0
      %p65 = por %p63, %p64
      %p66 = scmp.ne.s32.totalorder %s52, %s53
      %p67 = scmp.eq.s32.totalorder %s24, 1
      %p68 = por %p66, %p67
      %p70 = scmp.ne.s32.totalorder %s53, %s69
      %p71 = scmp.eq.s32.totalorder %s24, 0
      %p72 = por %p70, %p71
      %s73 = ssub.s32 %s25, %s44
      %s74 = ssub.s32 %s27, %s36
      %s75 = sor.u32 %s73, %s74
      %p76 = scmp.eq.s32.totalorder %s75, 0
      %s78 = sadd.s32 %s77, 1
      %s79 = scalar_select %p76, %s77, %s78
      %p82 = pneg %p76
      %p83 = scmp.eq.s32.totalorder %s18, 1
      %p84 = por %p82, %p83
      %p85 = scmp.ne.s32.totalorder %s77, %s80
      %p86 = scmp.eq.s32.totalorder %s18, 0
      %p87 = por %p85, %p86
      %p88 = scmp.ne.s32.totalorder %s77, %s80
      %p89 = scmp.eq.s32.totalorder %s23, 1
      %p90 = por %p88, %p89
      %p91 = scmp.ne.s32.totalorder %s80, %s81
      %p92 = scmp.eq.s32.totalorder %s23, 0
      %p93 = por %p91, %p92
      %p94 = scmp.ne.s32.totalorder %s80, %s81
      %p95 = scmp.eq.s32.totalorder %s24, 1
      %p96 = por %p94, %p95
      %p98 = scmp.ne.s32.totalorder %s81, %s97
      %p99 = scmp.eq.s32.totalorder %s24, 0
      %p100 = por %p98, %p99
      %s101 = ssub.s32 %s25, %s44
      %s102 = ssub.s32 %s27, %s36
      %s103 = sor.u32 %s101, %s102
      %p104 = scmp.eq.s32.totalorder %s103, 0
      %s106 = sadd.s32 %s105, 1
      %s107 = scalar_select %p104, %s105, %s106
      %p110 = pneg %p104
      %p111 = scmp.eq.s32.totalorder %s18, 1
      %p112 = por %p110, %p111
      %p113 = scmp.ne.s32.totalorder %s105, %s108
      %p114 = scmp.eq.s32.totalorder %s18, 0
      %p115 = por %p113, %p114
      %p116 = scmp.ne.s32.totalorder %s105, %s108
      %p117 = scmp.eq.s32.totalorder %s23, 1
      %p118 = por %p116, %p117
      %p119 = scmp.ne.s32.totalorder %s108, %s109
      %p120 = scmp.eq.s32.totalorder %s23, 0
      %p121 = por %p119, %p120
      %p122 = scmp.ne.s32.totalorder %s108, %s109
      %p123 = scmp.eq.s32.totalorder %s24, 1
      %p124 = por %p122, %p123
      %p126 = scmp.ne.s32.totalorder %s109, %s125
      %p127 = scmp.eq.s32.totalorder %s24, 0
      %p128 = por %p126, %p127
      %s129 = ssub.s32 %s25, %s44
      %s130 = ssub.s32 %s26, %s40
      %s131 = sor.u32 %s129, %s130
      %p132 = scmp.eq.s32.totalorder %s131, 0
      %s134 = sadd.s32 %s133, 1
      %s135 = scalar_select %p132, %s133, %s134
      %p138 = pneg %p132
      %p139 = scmp.eq.s32.totalorder %s18, 1
      %p140 = por %p138, %p139
      %p141 = scmp.ne.s32.totalorder %s133, %s136
      %p142 = scmp.eq.s32.totalorder %s18, 0
      %p143 = por %p141, %p142
      %p144 = scmp.ne.s32.totalorder %s133, %s136
      %p145 = scmp.eq.s32.totalorder %s23, 1
      %p146 = por %p144, %p145
      %p147 = scmp.ne.s32.totalorder %s136, %s137
      %p148 = scmp.eq.s32.totalorder %s23, 0
      %p149 = por %p147, %p148
      %p150 = scmp.ne.s32.totalorder %s136, %s137
      %p151 = scmp.eq.s32.totalorder %s24, 1
      %p152 = por %p150, %p151
      %p154 = scmp.ne.s32.totalorder %s137, %s153
      %p155 = scmp.eq.s32.totalorder %s24, 0
      %p156 = por %p154, %p155
      %p157 = scmp.le.s32.totalorder 1, %s18
      %p158 = scmp.lt.s32.totalorder %s18, 3
      %p159 = pnand %p157, %p158
      %p160 = pneg %p159
      // Predicated region
      $region9: #{tpu_custom_call.1} parent=5 // pred_check
        _
      $region10: #{tpu_custom_call.1} parent=5 // pred_check_branch
        %162 = sbr.rel (%p159) target = $region12
      $region11: #{tpu_custom_call.1} parent=5 // pred_region
        %s163 = ssub.s32 %s18, 1
      $region12: #{tpu_custom_call.1} parent=5 // pred_fallthru
        _
      %p164 = scmp.lt.s32.totalorder %s18, 2
      // Predicated region
      $region13: #{tpu_custom_call.1} parent=5 // pred_check
        %p165 = pneg %p164
      $region14: #{tpu_custom_call.1} parent=5 // pred_check_branch
        %167 = sbr.rel (%p165) target = $region16
      $region15: #{tpu_custom_call.1} parent=5 // pred_region
        // Predicated region
        $region17: #{tpu_custom_call.1} parent=15 // pred_check
          %p168 = pneg %p59
        $region18: #{tpu_custom_call.1} parent=15 // pred_check_branch
          %170 = sbr.rel (%p168) target = $region20
        $region19: #{tpu_custom_call.1} parent=15 // pred_region
          %s171 = sand.u32 %s49, 1
          %s172 = scalar_lea.sflag [#allocation6], %s171
          %s173 = sand.u32 %s49, 1
          %s174 = smul.addr %s173, 8
          %s175 = scalar_lea.vmem [#allocation5], %s174
          %177 = vsyncadd %s172, 0
          %s178 = sadd.s32 %s26, %s25
          %s179 = smul.addr %s178, 8
          %s180 = scalar_lea.hbm %s0, %s179
          %s182 = sshll.u32 %s180, 4
          %s183 = int_to_ptr.hbm [resolvable:$true] %s182
          %s184 = sshll.u32 %s175, 4
          %s185 = int_to_ptr.vmem [resolvable:$true] %s184
          %187 = dma.hbm_to_vmem [thread:$0]  %s183, 128, %s185, %s172
        $region20: #{tpu_custom_call.1} parent=15 // pred_fallthru
          _
        // Predicated region
        $region21: #{tpu_custom_call.1} parent=15 // pred_check
          %p188 = pneg %p87
        $region22: #{tpu_custom_call.1} parent=15 // pred_check_branch
          %190 = sbr.rel (%p188) target = $region24
        $region23: #{tpu_custom_call.1} parent=15 // pred_region
          %s191 = sand.u32 %s18, 1
          %s192 = scalar_lea.sflag [#allocation9], %s191
          %s193 = sand.u32 %s77, 1
          %s194 = smul.addr %s193, 8
          %s195 = scalar_lea.vmem [#allocation8], %s194
          %197 = vsyncadd %s192, 0
          %s198 = sadd.s32 %s27, %s25
          %s199 = smul.addr %s198, 8
          %s200 = scalar_lea.hbm %s1, %s199
          %s202 = sshll.u32 %s200, 4
          %s203 = int_to_ptr.hbm [resolvable:$true] %s202
          %s204 = sshll.u32 %s195, 4
          %s205 = int_to_ptr.vmem [resolvable:$true] %s204
          %207 = dma.hbm_to_vmem [thread:$0]  %s203, 128, %s205, %s192
        $region24: #{tpu_custom_call.1} parent=15 // pred_fallthru
          _
        // Predicated region
        $region25: #{tpu_custom_call.1} parent=15 // pred_check
          %p208 = pneg %p115
        $region26: #{tpu_custom_call.1} parent=15 // pred_check_branch
          %210 = sbr.rel (%p208) target = $region28
        $region27: #{tpu_custom_call.1} parent=15 // pred_region
          %s211 = sand.u32 %s18, 1
          %s212 = scalar_lea.sflag [#allocation9], %s211
          %s213 = sand.u32 %s105, 1
          %s214 = smul.addr %s213, 8
          %s215 = scalar_lea.vmem [#allocation10], %s214
          %217 = vsyncadd %s212, 0
          %s218 = sadd.s32 %s27, %s25
          %s219 = smul.addr %s218, 8
          %s220 = scalar_lea.hbm %s2, %s219
          %s222 = sshll.u32 %s220, 4
          %s223 = int_to_ptr.hbm [resolvable:$true] %s222
          %s224 = sshll.u32 %s215, 4
          %s225 = int_to_ptr.vmem [resolvable:$true] %s224
          %227 = dma.hbm_to_vmem [thread:$0]  %s223, 128, %s225, %s212
        $region28: #{tpu_custom_call.1} parent=15 // pred_fallthru
          _
      $region16: #{tpu_custom_call.1} parent=5 // pred_fallthru
        _
      %p228 = scmp.le.s32.totalorder 1, %s18
      %p229 = scmp.lt.s32.totalorder %s18, 3
      %p230 = pnand %p228, %p229
      %p231 = pneg %p230
      // Predicated region
      $region29: #{tpu_custom_call.1} parent=5 // pred_check
        _
      $region30: #{tpu_custom_call.1} parent=5 // pred_check_branch
        %233 = sbr.rel (%p230) target = $region32
      $region31: #{tpu_custom_call.1} parent=5 // pred_region
        %s234 = ssub.s32 %s18, 1
        %s235 = sand.u32 %s52, 1
        %s236 = scalar_lea.sflag [#allocation6], %s235
        %s237 = sand.u32 %s52, 1
        %s238 = smul.addr %s237, 8
        %s239 = scalar_lea.vmem [#allocation5], %s238
        // Predicated region
        $region33: #{tpu_custom_call.1} parent=31 // pred_check
          %p240 = pneg %p65
        $region34: #{tpu_custom_call.1} parent=31 // pred_check_branch
          %242 = sbr.rel (%p240) target = $region36
        $region35: #{tpu_custom_call.1} parent=31 // pred_region
          %244 = dma.done %s236, 128
        $region36: #{tpu_custom_call.1} parent=31 // pred_fallthru
          _
        %s245 = sand.u32 %s23, 1
        %s246 = scalar_lea.sflag [#allocation9], %s245
        %s247 = sand.u32 %s80, 1
        %s248 = smul.addr %s247, 8
        %s249 = scalar_lea.vmem [#allocation8], %s248
        // Predicated region
        $region37: #{tpu_custom_call.1} parent=31 // pred_check
          %p250 = pneg %p93
        $region38: #{tpu_custom_call.1} parent=31 // pred_check_branch
          %252 = sbr.rel (%p250) target = $region40
        $region39: #{tpu_custom_call.1} parent=31 // pred_region
          %254 = dma.done %s246, 128
        $region40: #{tpu_custom_call.1} parent=31 // pred_fallthru
          _
        %s255 = sand.u32 %s23, 1
        %s256 = scalar_lea.sflag [#allocation9], %s255
        %s257 = sand.u32 %s108, 1
        %s258 = smul.addr %s257, 8
        %s259 = scalar_lea.vmem [#allocation10], %s258
        // Predicated region
        $region41: #{tpu_custom_call.1} parent=31 // pred_check
          %p260 = pneg %p121
        $region42: #{tpu_custom_call.1} parent=31 // pred_check_branch
          %262 = sbr.rel (%p260) target = $region44
        $region43: #{tpu_custom_call.1} parent=31 // pred_region
          %264 = dma.done %s256, 128
        $region44: #{tpu_custom_call.1} parent=31 // pred_fallthru
          _
        %s265 = sand.u32 %s52, 1
        %s266 = scalar_lea.sflag [#allocation6], %s265
        %s267 = sand.u32 %s52, 1
        %s268 = smul.addr %s267, 8
        %s269 = scalar_lea.vmem [#allocation5], %s268
        %p270 = pneg %p65
        %p271 = pneg %p62
        %s272 = sand.u32 %s23, 1
        %s273 = scalar_lea.sflag [#allocation9], %s272
        %s274 = sand.u32 %s80, 1
        %s275 = smul.addr %s274, 8
        %s276 = scalar_lea.vmem [#allocation8], %s275
        %p277 = pneg %p93
        %p278 = pneg %p90
        %s279 = sand.u32 %s23, 1
        %s280 = scalar_lea.sflag [#allocation9], %s279
        %s281 = sand.u32 %s108, 1
        %s282 = smul.addr %s281, 8
        %s283 = scalar_lea.vmem [#allocation10], %s282
        %p284 = pneg %p121
        %p285 = pneg %p118
        %p286 = pneg %p149
        %p287 = pneg %p146
        %s288 = sand.u32 %s136, 1
        %s289 = scalar_lea.sflag [#allocation7], %s288
        %s290 = sand.u32 %s136, 1
        %s291 = smul.addr %s290, 8
        %s292 = scalar_lea.vmem [#allocation11], %s291
        %p293 = scmp.eq.s32.totalorder %s30, 0
        // Predicated region
        $region45: #{tpu_custom_call.1} parent=31 // pred_check
          %p294 = pneg %p293
        $region46: #{tpu_custom_call.1} parent=31 // pred_check_branch
          %296 = sbr.rel (%p294) target = $region48
        $region47: #{tpu_custom_call.1} parent=31 // pred_region
          %vm297 = vcmask 7168
          %298 = vst.msk [vmem:[#allocation2] sm:$0xff] %vm297, -1e+30
          %299 = vst.msk [vmem:[#allocation3] sm:$0xff] %vm297, 0.0
          %300 = vst [vmem:[#allocation4] sm:$0xff] 0.0
        $region48: #{tpu_custom_call.1} parent=31 // pred_fallthru
          _
        %v301 = vld [vmem:[%s239] sm:$0xff]
        %v302 = vmul.f32 %v301, 0.17677669
        %v303 = vld [vmem:[%s249] sm:$0xff]
        %v304 = vld [vmem:[%s259] sm:$0xff]
        %305 = vmatpush.xpose.msra.mxu0 0.0
        %306 = vmatpush.xpose.msra.mxu0 0.0
        %307 = vmatpush.xpose.msra.mxu0 0.0
        %308 = vmatpush.xpose.msra.mxu0 0.0
        %309 = vmatpush.xpose.msra.mxu0 0.0
        %310 = vmatpush.xpose.msra.mxu0 0.0
        %311 = vmatpush.xpose.msra.mxu0 0.0
        %312 = vmatpush.xpose.msra.mxu0 0.0
        %313 = vmatpush.xpose.msra.mxu0 0.0
        %314 = vmatpush.xpose.msra.mxu0 0.0
        %315 = vmatpush.xpose.msra.mxu0 0.0
        %316 = vmatpush.xpose.msra.mxu0 0.0
        %317 = vmatpush.xpose.msra.mxu0 0.0
        %318 = vmatpush.xpose.msra.mxu0 0.0
        %319 = vmatpush.xpose.msra.mxu0 0.0
        %320 = vmatpush.xpose.msra.mxu0 %v303
        %321 = vmatmul.f32.gmra.mxu0 %v302
        %v322 = vpop.f32.mrf.mxu0
        %v323 = vadd.f32 0.0, %v322
        %324 = vdwg.mxu0
        %v325 = vld [vmem:[#allocation2] sm:$0xff]
        %vm326 = vcmask 64512
        %v327 = vsel %vm326, %v323, -inf
        %328 = vmax.xlane.f32.xlu0 %v327
        %v329 = vpop.xlane.xlu0 %328
        %v330 = vmax.f32 %v325, %v329
        %v331 = vsub.f32 %v325, %v330
        %v332 = vmul.f32 %v331, 1.442695
        %v333 = vpow.pop %v332
        %335 = vset.pattern.permute.xlu0 0
        %336 = vperm.xlu0 %335, %v330
        %v337 = vpop.permute.xlu0 %336
        %v339 = vsub.f32 %v323, %v337
        %v340 = vmul.f32 %v339, 1.442695
        %v341 = vpow.pop %v340
        %v342 = vld [vmem:[#allocation3] sm:$0xff]
        %v343 = vmul.f32 %v333, %v342
        %v344 = vsel %vm326, %v341, 0.0
        %345 = vadd.xlane.f32.xlu0 %v344
        %v346 = vpop.xlane.xlu0 %345
        %v347 = vadd.f32 %v343, %v346
        %vm348 = vcmask 7168
        %349 = vst.msk [vmem:[#allocation3] sm:$0xff] %vm348, %v347
        %v350 = vld [vmem:[#allocation4] sm:$0xff]
        %352 = vset.pattern.permute.xlu0 0
        %353 = vperm.xlu0 %352, %v333
        %v354 = vpop.permute.xlu0 %353
        %v356 = vmul.f32 %v354, %v350
        %v358 = vsel %vm326, %v341, 0
        %360 = vmatpush.msra.mxu0 0.0
        %361 = vmatpush.msra.mxu0 0.0
        %362 = vmatpush.msra.mxu0 0.0
        %363 = vmatpush.msra.mxu0 0.0
        %364 = vmatpush.msra.mxu0 0.0
        %365 = vmatpush.msra.mxu0 0.0
        %366 = vmatpush.msra.mxu0 0.0
        %367 = vmatpush.msra.mxu0 0.0
        %368 = vmatpush.msra.mxu0 0.0
        %369 = vmatpush.msra.mxu0 0.0
        %370 = vmatpush.msra.mxu0 0.0
        %371 = vmatpush.msra.mxu0 0.0
        %372 = vmatpush.msra.mxu0 0.0
        %373 = vmatpush.msra.mxu0 0.0
        %374 = vmatpush.msra.mxu0 0.0
        %375 = vmatpush.msra.mxu0 %v304
        %376 = vmatmul.f32.gmra.mxu0 %v358
        %v377 = vpop.f32.mrf.mxu0
        %v378 = vadd.f32 0.0, %v377
        %379 = vdwg.mxu0
        %v380 = vadd.f32 %v356, %v378
        %381 = vst [vmem:[#allocation4] sm:$0xff] %v380
        %382 = vst.msk [vmem:[#allocation2] sm:$0xff] %vm348, %v330
        // Predicated region
        $region49: #{tpu_custom_call.1} parent=31 // pred_check
          %p383 = pneg %p293
        $region50: #{tpu_custom_call.1} parent=31 // pred_check_branch
          %385 = sbr.rel (%p383) target = $region52
        $region51: #{tpu_custom_call.1} parent=31 // pred_region
          %v386 = vld [vmem:[#allocation3] sm:$0xff]
          %v387 = vrcp.pop %v386
          %v388 = vmul.f32 %v386, %v387
          %v389 = vsub.f32 1.0, %v388
          %v390 = vmul.f32 %v387, %v389
          %v391 = vadd.f32 %v387, %v390
          %vm392 = vweird.f32 %v386
          %vm393 = vweird.f32 %v387
          %vm394 = vmor %vm392, %vm393
          %v395 = vsel %vm394, %v387, %v391
          %v396 = vand.u32 2147483647, %v386
          %vm397 = vcmp.eq.f32.partialorder %v396, 8.507059e+37
          %v398 = vand.u32 %v386, 2147483648
          %v399 = vor.u32 1.1754944e-38, %v398
          %v400 = vsel %vm397, %v399, %v395
          %v401 = vld [vmem:[#allocation4] sm:$0xff]
          %403 = vset.pattern.permute.xlu0 0
          %404 = vperm.xlu0 %403, %v400
          %v405 = vpop.permute.xlu0 %404
          %v407 = vmul.f32 %v401, %v405
          %408 = vst [vmem:[%s292] sm:$0xff] %v407
        $region52: #{tpu_custom_call.1} parent=31 // pred_fallthru
          _
        %s409 = sand.u32 %s136, 1
        %s410 = scalar_lea.sflag [#allocation7], %s409
        %s411 = sand.u32 %s136, 1
        %s412 = smul.addr %s411, 8
        %s413 = scalar_lea.vmem [#allocation11], %s412
        // Predicated region
        $region53: #{tpu_custom_call.1} parent=31 // pred_check
          %p414 = pneg %p146
        $region54: #{tpu_custom_call.1} parent=31 // pred_check_branch
          %416 = sbr.rel (%p414) target = $region56
        $region55: #{tpu_custom_call.1} parent=31 // pred_region
          %418 = vsyncadd %s410, 0
          %s419 = sadd.s32 %s29, %s28
          %s420 = smul.addr %s419, 8
          %s421 = scalar_lea.hbm %s3, %s420
          %s423 = sshll.u32 %s413, 4
          %s424 = int_to_ptr.vmem [resolvable:$true] %s423
          %s425 = sshll.u32 %s421, 4
          %s426 = int_to_ptr.hbm [resolvable:$true] %s425
          %428 = dma.vmem_to_hbm [thread:$0]  %s424, 128, %s426, %s410
        $region56: #{tpu_custom_call.1} parent=31 // pred_fallthru
          _
      $region32: #{tpu_custom_call.1} parent=5 // pred_fallthru
        _
      %p429 = scmp.le.s32.totalorder 2, %s18
      // Predicated region
      $region57: #{tpu_custom_call.1} parent=5 // pred_check
        %p430 = pneg %p429
      $region58: #{tpu_custom_call.1} parent=5 // pred_check_branch
        %432 = sbr.rel (%p430) target = $region60
      $region59: #{tpu_custom_call.1} parent=5 // pred_region
        %s433 = ssub.s32 %s18, 2
        // Predicated region
        $region61: #{tpu_custom_call.1} parent=59 // pred_check
          %p434 = pneg %p152
        $region62: #{tpu_custom_call.1} parent=59 // pred_check_branch
          %436 = sbr.rel (%p434) target = $region64
        $region63: #{tpu_custom_call.1} parent=59 // pred_region
          %s437 = sand.u32 %s137, 1
          %s438 = scalar_lea.sflag [#allocation7], %s437
          %s439 = sand.u32 %s137, 1
          %s440 = smul.addr %s439, 8
          %s441 = scalar_lea.vmem [#allocation11], %s440
          %443 = dma.done %s438, 128
        $region64: #{tpu_custom_call.1} parent=59 // pred_fallthru
          _
      $region60: #{tpu_custom_call.1} parent=5 // pred_fallthru
        _
    $region6: #{tpu_custom_call.1} parent=1 // loop_footer
      %s22 = sadd.s32 1, %s18
    $region7: #{tpu_custom_call.1} parent=1 // loop_footer_branch
      %17 = sbr.rel target = $region3
    $region8: #{tpu_custom_call.1} parent=1 // loop_exit
      _
    %444 = vsyncpa [#allocation6], 1
    %s445 = scalar_lea.sflag [#allocation6], 1
    %446 = vsyncpa %s445, 1
    %447 = vsyncpa [#allocation9], 1
    %s448 = scalar_lea.sflag [#allocation9], 1
    %449 = vsyncpa %s448, 1
    %450 = vsyncpa [#allocation7], 1
    %s451 = scalar_lea.sflag [#allocation7], 1
    %452 = vsyncpa %s451, 1

</llo_original>
